<compile_context>
chip_gen: v5e
topology: v5e:2x2
jax: 0.10.0
libtpu: 0.0.40
codegen_flags: <defaults>
</compile_context>

<pallas_src>
import functools

import jax
import jax.numpy as jnp
from jax.experimental import pallas as pl
from jax.experimental.pallas import tpu as pltpu


def _round_up(x: int, m: int) -> int:
    return (x + m - 1) // m * m


def feature_resizer_kernel(x_ref, w_ref, b_ref, g_ref, beta_ref, o_ref, *,
                           c2: int, eps: float, mxu_dtype):
    # x_ref: (TM, C1) input dtype; w_ref: (C1, C2p) mxu dtype;
    # b/g/beta: (1, C2p) f32; o_ref: (TM, C2p).
    # Cast activations to the MXU dtype at the dot (no wrapper pad/cast pass);
    # accumulate in f32 on the MXU.
    x = x_ref[...].astype(mxu_dtype)
    y = jnp.dot(x, w_ref[...], preferred_element_type=jnp.float32)
    y = y + b_ref[...]                               # (TM, C2p) f32

    # LayerNorm over the real C2 columns (eps = 1e-12, matches nn.LayerNorm).
    c2p = y.shape[-1]
    inv_c2 = 1.0 / c2
    # Padded output lanes of y are exactly 0 (zero W columns + zero bias), so
    # the row sum over the padded width equals the sum over the real c2 lanes.
    mean = jnp.sum(y, axis=-1, keepdims=True) * inv_c2
    centered = y - mean
    sq = jnp.sum(centered * centered, axis=-1, keepdims=True)
    if c2p != c2:
        # Padded lanes of `centered` are exactly -mean: remove their
        # contribution analytically instead of masking (saves a full-tile
        # iota + compare + select every grid step). Clamp guards fp rounding.
        sq = jnp.maximum(sq - (c2p - c2) * (mean * mean), 0.0)
    var = sq * inv_c2

    # Fold gamma into the inverse-stddev scale; rsqrt rides the EUP slot.
    scale = g_ref[...] * jax.lax.rsqrt(var + eps)
    out = centered * scale + beta_ref[...]           # padded lanes -> 0 (gamma/beta pads are 0)

    # Dropout (eval mode) = identity.
    o_ref[...] = out.astype(o_ref.dtype)


def prepare_feature_resizer_params(w, bias, gamma, beta, *, mxu_dtype=jnp.bfloat16):
    """Transpose/pad/cast the grid-invariant parameters once (cacheable for inference)."""
    C2 = w.shape[0]
    c2p = _round_up(C2, 128)
    pad = c2p - C2
    w_t = jnp.pad(w.T.astype(mxu_dtype), ((0, 0), (0, pad)))            # (C1, C2p)
    b2d = jnp.pad(bias.astype(jnp.float32), (0, pad)).reshape(1, c2p)
    g2d = jnp.pad(gamma.astype(jnp.float32), (0, pad)).reshape(1, c2p)
    beta2d = jnp.pad(beta.astype(jnp.float32), (0, pad)).reshape(1, c2p)
    return w_t, b2d, g2d, beta2d


def feature_resizer(x, w, bias, gamma, beta, *, tm=512, mxu_dtype=jnp.bfloat16,
                    out_dtype=None, eps=1e-12, params=None):
    """x: (B, S, C1); w: (C2, C1) (PyTorch nn.Linear layout); bias/gamma/beta: (C2,)."""
    B, S, C1 = x.shape
    C2 = w.shape[0]
    M = B * S
    out_dtype = out_dtype if out_dtype is not None else x.dtype
    mxu_dtype = mxu_dtype if mxu_dtype is not None else x.dtype

    if params is None:
        params = prepare_feature_resizer_params(w, bias, gamma, beta, mxu_dtype=mxu_dtype)
    w_t, b2d, g2d, beta2d = params
    c2p = w_t.shape[1]

    # Flattened activations go in unpadded and uncast (free reshape).
    x2d = x.reshape(M, C1)

    xb = jnp.dtype(x.dtype).itemsize
    ob = jnp.dtype(out_dtype).itemsize
    wb = jnp.dtype(mxu_dtype).itemsize

    # Row tile: large for HBM roofline, but at least 2 grid iterations when M
    # allows so the "parallel" axis can shard across v7x's two TensorCores.
    tm_eff = max(16, min(tm, _round_up(pl.cdiv(M, 2), 16)))

    # Generation-aware VMEM budget (v7x: 64 MiB/core; v5e/v6e: 128 MiB).
    try:
        vmem_cap = pltpu.get_tpu_info().vmem_capacity_bytes
    except Exception:  # conservative fallback
        vmem_cap = 64 << 20
    vmem_budget = int(vmem_cap * 3 // 4)

    def footprint(tm_, param_bufs):
        tiles = 2 * tm_ * (C1 * xb + c2p * ob)            # double-buffered x / out tiles
        param_b = param_bufs * (C1 * c2p * wb + 3 * c2p * 4)
        interm = tm_ * c2p * 4                            # f32 y tile (vregs / spill)
        return tiles + param_b + interm

    # Shrink the row tile until the footprint fits the budget.
    # TODO(synk): for very large C1*C2 (weight alone > VMEM) a K grid axis with an
    # f32 accumulator scratch + LayerNorm epilogue is required; not implemented.
    while tm_eff > 16 and footprint(tm_eff, 1) > vmem_budget:
        tm_eff = max(16, _round_up(tm_eff // 2, 16))

    grid_m = pl.cdiv(M, tm_eff)
    required = footprint(tm_eff, 2)  # also covers the double-buffered-params fallback
    vmem_limit = max(int(min(max(required + (4 << 20), 32 << 20), vmem_budget)), required)

    cost = pl.CostEstimate(
        flops=2 * grid_m * tm_eff * C1 * c2p,
        transcendentals=grid_m * tm_eff,                  # one rsqrt per row
        bytes_accessed=(grid_m * tm_eff * C1 * xb         # x reads (incl. ragged tail tile)
                        + C1 * c2p * wb + 3 * c2p * 4     # resident params
                        + grid_m * tm_eff * c2p * ob),    # output writes
    )

    kernel = functools.partial(feature_resizer_kernel, c2=C2, eps=eps, mxu_dtype=mxu_dtype)

    def build(param_pipeline_mode):
        def invariant(shape):
            return pl.BlockSpec(shape, lambda i: (0, 0), pipeline_mode=param_pipeline_mode)
        return pl.pallas_call(
            kernel,
            out_shape=jax.ShapeDtypeStruct((M, c2p), out_dtype),
            grid_spec=pltpu.PrefetchScalarGridSpec(
                num_scalar_prefetch=0,
                grid=(grid_m,),
                in_specs=[
                    pl.BlockSpec((tm_eff, C1), lambda i: (i, 0)),  # x rows, tiled (ragged tail ok)
                    invariant((C1, c2p)),                          # weight (grid-invariant)
                    invariant((1, c2p)),                           # bias
                    invariant((1, c2p)),                           # ln gamma
                    invariant((1, c2p)),                           # ln beta
                ],
                out_specs=pl.BlockSpec((tm_eff, c2p), lambda i: (i, 0)),
            ),
            compiler_params=pltpu.CompilerParams(
                dimension_semantics=("parallel",),
                vmem_limit_bytes=vmem_limit,
            ),
            cost_estimate=cost,
        )

    # Single-buffer the grid-invariant operands (constant index_map -> no
    # pipelining benefit); fall back to default double-buffering if the
    # installed JAX rejects Buffered(1).
    single = pl.Buffered(1) if hasattr(pl, "Buffered") else None
    try:
        out = build(single)(x2d, w_t, b2d, g2d, beta2d)
    except Exception:
        if single is None:
            raise
        out = build(None)(x2d, w_t, b2d, g2d, beta2d)

    if c2p != C2:  # slice only when C2 genuinely needed lane padding
        out = out[:, :C2]
    return out.reshape(B, S, C2)


if __name__ == "__main__":
    # Small shapes consistent with the module: (B, S, C1) embeddings -> (B, S, C2).
    B, S = 2, 8
    C1, C2 = 32, 64

    key = jax.random.PRNGKey(0)
    kx, kw, kb = jax.random.split(key, 3)

    x = jax.random.normal(kx, (B, S, C1), dtype=jnp.float32)

    # Deterministic parameter init (nn.Linear-like scale); LayerNorm: gamma=1, beta=0.
    bound = 1.0 / (C1 ** 0.5)
    w = jax.random.uniform(kw, (C2, C1), minval=-bound, maxval=bound, dtype=jnp.float32)
    bias = jax.random.uniform(kb, (C2,), minval=-bound, maxval=bound, dtype=jnp.float32)
    gamma = jnp.ones((C2,), dtype=jnp.float32)
    beta = jnp.zeros((C2,), dtype=jnp.float32)

    # Grid-invariant params prepared once (cacheable across inference calls).
    params = prepare_feature_resizer_params(w, bias, gamma, beta)

    out = feature_resizer(x, w, bias, gamma, beta, params=params)
    out = jax.block_until_ready(out)

    # Reference in plain JAX, using the same bf16 operand rounding as the kernel
    # (f32 accumulation), then f32 LayerNorm.
    xq = x.astype(jnp.bfloat16).astype(jnp.float32)
    wq = w.astype(jnp.bfloat16).astype(jnp.float32)
    y_ref = jnp.matmul(xq, wq.T, precision=jax.lax.Precision.HIGHEST) + bias
    mean = y_ref.mean(-1, keepdims=True)
    var = ((y_ref - mean) ** 2).mean(-1, keepdims=True)
    y_ref = (y_ref - mean) / jnp.sqrt(var + 1e-12) * gamma + beta

    assert out.shape == (B, S, C2)
    assert jnp.allclose(out, y_ref, atol=2e-3, rtol=2e-3), (
        "mismatch vs reference, max abs diff = "
        f"{float(jnp.max(jnp.abs(out - y_ref)))}")

    print("KERNEL_OK")
</pallas_src>

<mosaic_0001>
module attributes {stable_mosaic.version = 11 : i64} {
  func.func @feature_resizer_kernel(%arg0: i32, %arg1: memref<16x32xf32, #tpu.memory_space<vmem>>, %arg2: memref<32x128xbf16, #tpu.memory_space<vmem>>, %arg3: memref<1x128xf32, #tpu.memory_space<vmem>>, %arg4: memref<1x128xf32, #tpu.memory_space<vmem>>, %arg5: memref<1x128xf32, #tpu.memory_space<vmem>>, %arg6: memref<16x128xf32, #tpu.memory_space<vmem>>) attributes {dimension_semantics = [#tpu.dimension_semantics<parallel>], iteration_bounds = array<i64: 1>, scalar_prefetch = 0 : i64, scratch_operands = 0 : i64, tpu.core_type = #tpu.core_type<tc>, window_params = [{transform_indices = @transform_0, window_bounds = array<i64: 16, 32>}, {pipeline_mode = #tpu.pipeline_mode<synchronous>, transform_indices = @transform_1, window_bounds = array<i64: 32, 128>}, {pipeline_mode = #tpu.pipeline_mode<synchronous>, transform_indices = @transform_2, window_bounds = array<i64: 1, 128>}, {pipeline_mode = #tpu.pipeline_mode<synchronous>, transform_indices = @transform_3, window_bounds = array<i64: 1, 128>}, {pipeline_mode = #tpu.pipeline_mode<synchronous>, transform_indices = @transform_4, window_bounds = array<i64: 1, 128>}, {transform_indices = @transform_5, window_bounds = array<i64: 16, 128>}]} {
    %c0 = arith.constant 0 : index
    %c0_0 = arith.constant 0 : index
    %0 = vector.load %arg1[%c0, %c0_0] : memref<16x32xf32, #tpu.memory_space<vmem>>, vector<16x32xf32>
    %1 = arith.truncf %0 : vector<16x32xf32> to vector<16x32xbf16>
    %c0_1 = arith.constant 0 : index
    %c0_2 = arith.constant 0 : index
    %2 = vector.load %arg2[%c0_1, %c0_2] : memref<32x128xbf16, #tpu.memory_space<vmem>>, vector<32x128xbf16>
    %cst = arith.constant dense<0.000000e+00> : vector<16x128xf32>
    %3 = tpu.matmul %1, %2, %cst {dimension_numbers = #tpu.dot_dimension_numbers<[1], [0], [0], [1], [0, 0, 1, 1], [], []>} : vector<16x32xbf16>, vector<32x128xbf16>, vector<16x128xf32> -> vector<16x128xf32>
    %c0_3 = arith.constant 0 : index
    %c0_4 = arith.constant 0 : index
    %4 = vector.load %arg3[%c0_3, %c0_4] : memref<1x128xf32, #tpu.memory_space<vmem>>, vector<1x128xf32>
    %5 = vector.broadcast %4 : vector<1x128xf32> to vector<16x128xf32>
    %6 = arith.addf %3, %5 : vector<16x128xf32>
    %cst_5 = arith.constant dense<0.000000e+00> : vector<16xf32>
    %7 = vector.multi_reduction <add>, %6, %cst_5 [1] : vector<16x128xf32> to vector<16xf32>
    %8 = vector.shape_cast %7 : vector<16xf32> to vector<16x1xf32>
    %cst_6 = arith.constant 1.562500e-02 : f32
    %9 = vector.broadcast %cst_6 : f32 to vector<16x1xf32>
    %10 = arith.mulf %8, %9 : vector<16x1xf32>
    %11 = vector.broadcast %10 : vector<16x1xf32> to vector<16x128xf32>
    %12 = arith.subf %6, %11 : vector<16x128xf32>
    %13 = arith.mulf %12, %12 : vector<16x128xf32>
    %cst_7 = arith.constant dense<0.000000e+00> : vector<16xf32>
    %14 = vector.multi_reduction <add>, %13, %cst_7 [1] : vector<16x128xf32> to vector<16xf32>
    %15 = vector.shape_cast %14 : vector<16xf32> to vector<16x1xf32>
    %16 = arith.mulf %10, %10 : vector<16x1xf32>
    %cst_8 = arith.constant 6.400000e+01 : f32
    %17 = vector.broadcast %cst_8 : f32 to vector<16x1xf32>
    %18 = arith.mulf %17, %16 : vector<16x1xf32>
    %19 = arith.subf %15, %18 : vector<16x1xf32>
    %cst_9 = arith.constant 0.000000e+00 : f32
    %20 = vector.broadcast %cst_9 : f32 to vector<16x1xf32>
    %21 = arith.maximumf %19, %20 : vector<16x1xf32>
    %cst_10 = arith.constant 1.562500e-02 : f32
    %22 = vector.broadcast %cst_10 : f32 to vector<16x1xf32>
    %23 = arith.mulf %21, %22 : vector<16x1xf32>
    %c0_11 = arith.constant 0 : index
    %c0_12 = arith.constant 0 : index
    %24 = vector.load %arg4[%c0_11, %c0_12] : memref<1x128xf32, #tpu.memory_space<vmem>>, vector<1x128xf32>
    %cst_13 = arith.constant 9.99999996E-13 : f32
    %25 = vector.broadcast %cst_13 : f32 to vector<16x1xf32>
    %26 = arith.addf %23, %25 : vector<16x1xf32>
    %27 = math.rsqrt %26 : vector<16x1xf32>
    %28 = vector.broadcast %24 : vector<1x128xf32> to vector<16x128xf32>
    %29 = vector.broadcast %27 : vector<16x1xf32> to vector<16x128xf32>
    %30 = arith.mulf %28, %29 : vector<16x128xf32>
    %31 = arith.mulf %12, %30 : vector<16x128xf32>
    %c0_14 = arith.constant 0 : index
    %c0_15 = arith.constant 0 : index
    %32 = vector.load %arg5[%c0_14, %c0_15] : memref<1x128xf32, #tpu.memory_space<vmem>>, vector<1x128xf32>
    %33 = vector.broadcast %32 : vector<1x128xf32> to vector<16x128xf32>
    %34 = arith.addf %31, %33 : vector<16x128xf32>
    %c0_16 = arith.constant 0 : index
    %c0_17 = arith.constant 0 : index
    %35 = vector.load %arg6[%c0_16, %c0_17] : memref<16x128xf32, #tpu.memory_space<vmem>>, vector<16x128xf32>
    tpu.vector_store %arg6[%c0_16, %c0_17], %34 {strides = array<i32>} : memref<16x128xf32, #tpu.memory_space<vmem>>, vector<16x128xf32>,
    return
  }
  func.func @transform_0(%arg0: i32) -> (i32, i32) {
    %c0_i32 = arith.constant 0 : i32
    %c0_i32_0 = arith.constant 0 : i32
    return %arg0, %c0_i32 : i32, i32
  }
  func.func @transform_1(%arg0: i32) -> (i32, i32) {
    %c0_i32 = arith.constant 0 : i32
    %c0_i32_0 = arith.constant 0 : i32
    %c0_i32_1 = arith.constant 0 : i32
    return %c0_i32, %c0_i32_0 : i32, i32
  }
  func.func @transform_2(%arg0: i32) -> (i32, i32) {
    %c0_i32 = arith.constant 0 : i32
    %c0_i32_0 = arith.constant 0 : i32
    %c0_i32_1 = arith.constant 0 : i32
    return %c0_i32, %c0_i32_0 : i32, i32
  }
  func.func @transform_3(%arg0: i32) -> (i32, i32) {
    %c0_i32 = arith.constant 0 : i32
    %c0_i32_0 = arith.constant 0 : i32
    %c0_i32_1 = arith.constant 0 : i32
    return %c0_i32, %c0_i32_0 : i32, i32
  }
  func.func @transform_4(%arg0: i32) -> (i32, i32) {
    %c0_i32 = arith.constant 0 : i32
    %c0_i32_0 = arith.constant 0 : i32
    %c0_i32_1 = arith.constant 0 : i32
    return %c0_i32, %c0_i32_0 : i32, i32
  }
  func.func @transform_5(%arg0: i32) -> (i32, i32) {
    %c0_i32 = arith.constant 0 : i32
    %c0_i32_0 = arith.constant 0 : i32
    return %arg0, %c0_i32 : i32, i32
  }
}

module attributes {stable_mosaic.version = 11 : i64} {
  func.func @feature_resizer_kernel(%arg0: i32, %arg1: memref<16x32xf32, #tpu.memory_space<vmem>>, %arg2: memref<32x128xbf16, #tpu.memory_space<vmem>>, %arg3: memref<1x128xf32, #tpu.memory_space<vmem>>, %arg4: memref<1x128xf32, #tpu.memory_space<vmem>>, %arg5: memref<1x128xf32, #tpu.memory_space<vmem>>, %arg6: memref<16x128xf32, #tpu.memory_space<vmem>>) attributes {dimension_semantics = [#tpu.dimension_semantics<parallel>], iteration_bounds = array<i64: 1>, scalar_prefetch = 0 : i64, scratch_operands = 0 : i64, tpu.core_type = #tpu.core_type<tc>, window_params = [{transform_indices = @transform_0, window_bounds = array<i64: 16, 32>}, {pipeline_mode = #tpu.pipeline_mode<synchronous>, transform_indices = @transform_1, window_bounds = array<i64: 32, 128>}, {pipeline_mode = #tpu.pipeline_mode<synchronous>, transform_indices = @transform_2, window_bounds = array<i64: 1, 128>}, {pipeline_mode = #tpu.pipeline_mode<synchronous>, transform_indices = @transform_3, window_bounds = array<i64: 1, 128>}, {pipeline_mode = #tpu.pipeline_mode<synchronous>, transform_indices = @transform_4, window_bounds = array<i64: 1, 128>}, {transform_indices = @transform_5, window_bounds = array<i64: 16, 128>}]} {
    %c0 = arith.constant 0 : index
    %c0_0 = arith.constant 0 : index
    %0 = vector.load %arg1[%c0, %c0_0] : memref<16x32xf32, #tpu.memory_space<vmem>>, vector<16x32xf32>
    %1 = arith.truncf %0 : vector<16x32xf32> to vector<16x32xbf16>
    %c0_1 = arith.constant 0 : index
    %c0_2 = arith.constant 0 : index
    %2 = vector.load %arg2[%c0_1, %c0_2] : memref<32x128xbf16, #tpu.memory_space<vmem>>, vector<32x128xbf16>
    %cst = arith.constant dense<0.000000e+00> : vector<16x128xf32>
    %3 = tpu.matmul %1, %2, %cst {dimension_numbers = #tpu.dot_dimension_numbers<[1], [0], [0], [1], [0, 0, 1, 1], [], []>} : vector<16x32xbf16>, vector<32x128xbf16>, vector<16x128xf32> -> vector<16x128xf32>
    %c0_3 = arith.constant 0 : index
    %c0_4 = arith.constant 0 : index
    %4 = vector.load %arg3[%c0_3, %c0_4] : memref<1x128xf32, #tpu.memory_space<vmem>>, vector<1x128xf32>
    %5 = vector.broadcast %4 : vector<1x128xf32> to vector<16x128xf32>
    %6 = arith.addf %3, %5 : vector<16x128xf32>
    %cst_5 = arith.constant dense<0.000000e+00> : vector<16xf32>
    %7 = vector.multi_reduction <add>, %6, %cst_5 [1] : vector<16x128xf32> to vector<16xf32>
    %8 = vector.shape_cast %7 : vector<16xf32> to vector<16x1xf32>
    %cst_6 = arith.constant 1.562500e-02 : f32
    %9 = vector.broadcast %cst_6 : f32 to vector<16x1xf32>
    %10 = arith.mulf %8, %9 : vector<16x1xf32>
    %11 = vector.broadcast %10 : vector<16x1xf32> to vector<16x128xf32>
    %12 = arith.subf %6, %11 : vector<16x128xf32>
    %13 = arith.mulf %12, %12 : vector<16x128xf32>
    %cst_7 = arith.constant dense<0.000000e+00> : vector<16xf32>
    %14 = vector.multi_reduction <add>, %13, %cst_7 [1] : vector<16x128xf32> to vector<16xf32>
    %15 = vector.shape_cast %14 : vector<16xf32> to vector<16x1xf32>
    %16 = arith.mulf %10, %10 : vector<16x1xf32>
    %cst_8 = arith.constant 6.400000e+01 : f32
    %17 = vector.broadcast %cst_8 : f32 to vector<16x1xf32>
    %18 = arith.mulf %17, %16 : vector<16x1xf32>
    %19 = arith.subf %15, %18 : vector<16x1xf32>
    %cst_9 = arith.constant 0.000000e+00 : f32
    %20 = vector.broadcast %cst_9 : f32 to vector<16x1xf32>
    %21 = arith.maximumf %19, %20 : vector<16x1xf32>
    %cst_10 = arith.constant 1.562500e-02 : f32
    %22 = vector.broadcast %cst_10 : f32 to vector<16x1xf32>
    %23 = arith.mulf %21, %22 : vector<16x1xf32>
    %c0_11 = arith.constant 0 : index
    %c0_12 = arith.constant 0 : index
    %24 = vector.load %arg4[%c0_11, %c0_12] : memref<1x128xf32, #tpu.memory_space<vmem>>, vector<1x128xf32>
    %cst_13 = arith.constant 9.99999996E-13 : f32
    %25 = vector.broadcast %cst_13 : f32 to vector<16x1xf32>
    %26 = arith.addf %23, %25 : vector<16x1xf32>
    %27 = math.rsqrt %26 : vector<16x1xf32>
    %28 = vector.broadcast %24 : vector<1x128xf32> to vector<16x128xf32>
    %29 = vector.broadcast %27 : vector<16x1xf32> to vector<16x128xf32>
    %30 = arith.mulf %28, %29 : vector<16x128xf32>
    %31 = arith.mulf %12, %30 : vector<16x128xf32>
    %c0_14 = arith.constant 0 : index
    %c0_15 = arith.constant 0 : index
    %32 = vector.load %arg5[%c0_14, %c0_15] : memref<1x128xf32, #tpu.memory_space<vmem>>, vector<1x128xf32>
    %33 = vector.broadcast %32 : vector<1x128xf32> to vector<16x128xf32>
    %34 = arith.addf %31, %33 : vector<16x128xf32>
    %c0_16 = arith.constant 0 : index
    %c0_17 = arith.constant 0 : index
    %35 = vector.load %arg6[%c0_16, %c0_17] : memref<16x128xf32, #tpu.memory_space<vmem>>, vector<16x128xf32>
    tpu.vector_store %arg6[%c0_16, %c0_17], %34 {strides = array<i32>} : memref<16x128xf32, #tpu.memory_space<vmem>>, vector<16x128xf32>,
    return
  }
  func.func @transform_0(%arg0: i32) -> (i32, i32) {
    %c0_i32 = arith.constant 0 : i32
    %c0_i32_0 = arith.constant 0 : i32
    return %arg0, %c0_i32 : i32, i32
  }
  func.func @transform_1(%arg0: i32) -> (i32, i32) {
    %c0_i32 = arith.constant 0 : i32
    %c0_i32_0 = arith.constant 0 : i32
    %c0_i32_1 = arith.constant 0 : i32
    return %c0_i32, %c0_i32_0 : i32, i32
  }
  func.func @transform_2(%arg0: i32) -> (i32, i32) {
    %c0_i32 = arith.constant 0 : i32
    %c0_i32_0 = arith.constant 0 : i32
    %c0_i32_1 = arith.constant 0 : i32
    return %c0_i32, %c0_i32_0 : i32, i32
  }
  func.func @transform_3(%arg0: i32) -> (i32, i32) {
    %c0_i32 = arith.constant 0 : i32
    %c0_i32_0 = arith.constant 0 : i32
    %c0_i32_1 = arith.constant 0 : i32
    return %c0_i32, %c0_i32_0 : i32, i32
  }
  func.func @transform_4(%arg0: i32) -> (i32, i32) {
    %c0_i32 = arith.constant 0 : i32
    %c0_i32_0 = arith.constant 0 : i32
    %c0_i32_1 = arith.constant 0 : i32
    return %c0_i32, %c0_i32_0 : i32, i32
  }
  func.func @transform_5(%arg0: i32) -> (i32, i32) {
    %c0_i32 = arith.constant 0 : i32
    %c0_i32_0 = arith.constant 0 : i32
    return %arg0, %c0_i32 : i32, i32
  }
}

</mosaic_0001>

<llo_original>
// kernel: tpu_custom_call.1
$region0: #{tpu_custom_call.1}
  #allocation0 [shape = 'u32[]', space=smem, size = 0x4, offset = 0x4, fixed_abs, tag = 'smem constant byte address 0x4 - core index']
  #allocation1 [shape = 'u32[72,128]{1,0:T(1,128)}', space=vmem, size = 0x9000, scoped, tag = 'internal scratch']
  %s0 = inlined_call_operand.hbm [shape: f32[16,32], index: 0, kind: input, shape index: {}]
  %s1 = inlined_call_operand.hbm [shape: bf16[32,128], index: 1, kind: input, shape index: {}]
  %s2 = inlined_call_operand.vmem [shape: f32[1,128], index: 2, kind: input, shape index: {}]
  %s3 = inlined_call_operand.vmem [shape: f32[1,128], index: 3, kind: input, shape index: {}]
  %s4 = inlined_call_operand.vmem [shape: f32[1,128], index: 4, kind: input, shape index: {}]
  %s5 = inlined_call_operand.hbm [shape: f32[16,128], index: 5, kind: output, shape index: {}]
  %s6 = sld [smem:[#allocation0]]
  $region38: #{tpu_custom_call.1} parent=0
    _
  %s8 = ssub.s32 1, %s6
  %s9 = scalar_select 0, %s8, %s6
  $region1: #{tpu_custom_call.1} parent=0
    #allocation2 [shape = 'u8[8192]{0}', space=vmem, size = 0x2000, scoped, tag = 'input window, operand 0, single buffered']
    #allocation3 [shape = 's32[1]{0}', space=sflag, size = 0x4, scoped, tag = 'scoped memory for tpu_custom_call.1']
    #allocation4 [shape = 's32[1]{0}', space=sflag, size = 0x4, scoped, tag = 'scoped memory for tpu_custom_call.1']
    #allocation5 [shape = 'u8[8192]{0}', space=vmem, size = 0x2000, scoped, tag = 'input window, operand 1, single buffered']
    #allocation6 [shape = 's32[1]{0}', space=sflag, size = 0x4, scoped, tag = 'scoped memory for tpu_custom_call.1']
    #allocation7 [shape = 'u8[8192]{0}', space=vmem, size = 0x2000, scoped, tag = 'output window, operand 0, single buffered']
    %10 = vsyncpa [#allocation3], 0
    %11 = vsyncpa [#allocation6], 0
    %12 = vsyncpa [#allocation4], 0
    // Predicated region
    $region2: #{tpu_custom_call.1} parent=1 // pred_check
      _
    $region3: #{tpu_custom_call.1} parent=1 // pred_check_branch
      %14 = sbr.rel (0) target = $region5
    $region4: #{tpu_custom_call.1} parent=1 // pred_region
      %16 = vsyncadd [#allocation3], 0
      %s17 = sshll.u32 %s0, 4
      %s18 = int_to_ptr.hbm [resolvable:$true] %s17
      %s19 = sshll.u32 [#allocation2], 4
      %s20 = int_to_ptr.vmem [resolvable:$true] %s19
      %25 = dma.hbm_to_vmem [thread:$0]  %s18, 256, %s20, [#allocation3], 128, 128, 8
    $region5: #{tpu_custom_call.1} parent=1 // pred_fallthru
      _
    // Predicated region
    $region6: #{tpu_custom_call.1} parent=1 // pred_check
      _
    $region7: #{tpu_custom_call.1} parent=1 // pred_check_branch
      %27 = sbr.rel (0) target = $region9
    $region8: #{tpu_custom_call.1} parent=1 // pred_region
      %29 = vsyncadd [#allocation6], 0
      %s30 = sshll.u32 %s1, 4
      %s31 = int_to_ptr.hbm [resolvable:$true] %s30
      %s32 = sshll.u32 [#allocation5], 4
      %s33 = int_to_ptr.vmem [resolvable:$true] %s32
      %38 = dma.hbm_to_vmem [thread:$0]  %s31, 256, %s33, [#allocation6], 64, 64, 4
    $region9: #{tpu_custom_call.1} parent=1 // pred_fallthru
      _
    // Predicated region
    $region10: #{tpu_custom_call.1} parent=1 // pred_check
      _
    $region11: #{tpu_custom_call.1} parent=1 // pred_check_branch
      %40 = sbr.rel (0) target = $region13
    $region12: #{tpu_custom_call.1} parent=1 // pred_region
      _
    $region13: #{tpu_custom_call.1} parent=1 // pred_fallthru
      _
    // Predicated region
    $region14: #{tpu_custom_call.1} parent=1 // pred_check
      _
    $region15: #{tpu_custom_call.1} parent=1 // pred_check_branch
      %42 = sbr.rel (0) target = $region17
    $region16: #{tpu_custom_call.1} parent=1 // pred_region
      _
    $region17: #{tpu_custom_call.1} parent=1 // pred_fallthru
      _
    // Predicated region
    $region18: #{tpu_custom_call.1} parent=1 // pred_check
      _
    $region19: #{tpu_custom_call.1} parent=1 // pred_check_branch
      %44 = sbr.rel (0) target = $region21
    $region20: #{tpu_custom_call.1} parent=1 // pred_region
      _
    $region21: #{tpu_custom_call.1} parent=1 // pred_fallthru
      _
    // Predicated region
    $region22: #{tpu_custom_call.1} parent=1 // pred_check
      _
    $region23: #{tpu_custom_call.1} parent=1 // pred_check_branch
      %46 = sbr.rel (0) target = $region25
    $region24: #{tpu_custom_call.1} parent=1 // pred_region
      %48 = dma.done [#allocation3], 256
    $region25: #{tpu_custom_call.1} parent=1 // pred_fallthru
      _
    // Predicated region
    $region26: #{tpu_custom_call.1} parent=1 // pred_check
      _
    $region27: #{tpu_custom_call.1} parent=1 // pred_check_branch
      %50 = sbr.rel (0) target = $region29
    $region28: #{tpu_custom_call.1} parent=1 // pred_region
      %52 = dma.done [#allocation6], 256
    $region29: #{tpu_custom_call.1} parent=1 // pred_fallthru
      _
    %v54 = vld [vmem:[#allocation2] sm:$0xff]
    %v55 = vld [vmem:[#allocation2 + $0x8] sm:$0xff]
    %v56 = vpack.c.bf16 %v55, %v54
    %v57 = vld [vmem:[#allocation5] sm:$0xf]
    %v58 = vld [vmem:[#allocation5 + $0x4] sm:$0xf]
    %v59 = vld [vmem:[#allocation5 + $0x8] sm:$0xf]
    %v60 = vld [vmem:[#allocation5 + $0xc] sm:$0xf]
    %v61 = vld [vmem:[%s2] sm:$0x1]
    %v63 = vperm.slane %v61, 0
    %v69 = vunpack.c.l.b16 %v57
    %v70 = vunpack.c.l.b16 %v58
    %v71 = vunpack.c.l.b16 %v59
    %v72 = vunpack.c.l.b16 %v60
    %v73 = vpack.c.b16 %v70, %v69
    %v74 = vpack.c.b16 %v72, %v71
    %vm77 = vcmask 261120
    %v79 = vsel %vm77, %v56, 0
    %81 = vmatpush.bf16.msra.mxu0 0
    %82 = vmatpush.bf16.msra.mxu0 0
    %83 = vmatpush.bf16.msra.mxu0 0
    %84 = vmatpush.bf16.msra.mxu0 0
    %85 = vmatpush.bf16.msra.mxu0 0
    %86 = vmatpush.bf16.msra.mxu0 0
    %87 = vmatpush.bf16.msra.mxu0 %v74
    %88 = vmatpush.bf16.msra.mxu0 %v73
    %89 = vmatmul.bf16.gmra.mxu0 %v79
    %v90 = vpop.f32.mrf.mxu0
    %v91 = vadd.f32 %v63, %v90
    %v92 = vpop.f32.mrf.mxu0
    %v93 = vadd.f32 %v63, %v92
    %94 = vdwg.mxu0
    %95 = vadd.xlane.f32.xlu0 %v91
    %v96 = vpop.xlane.xlu0 %95
    %97 = vadd.xlane.f32.xlu0 %v93
    %v98 = vpop.xlane.xlu0 %97
    %v99 = vmul.f32 %v96, 0.015625
    %v100 = vmul.f32 %v98, 0.015625
    %v101 = vsub.f32 %v91, %v99
    %v102 = vsub.f32 %v93, %v100
    %v103 = vmul.f32 %v101, %v101
    %v104 = vmul.f32 %v102, %v102
    %105 = vadd.xlane.f32.xlu0 %v103
    %v106 = vpop.xlane.xlu0 %105
    %107 = vadd.xlane.f32.xlu0 %v104
    %v108 = vpop.xlane.xlu0 %107
    %v109 = vmul.f32 %v99, %v99
    %v110 = vmul.f32 %v100, %v100
    %v111 = vmul.f32 %v109, 64.0
    %v112 = vmul.f32 %v110, 64.0
    %v113 = vsub.f32 %v106, %v111
    %v114 = vsub.f32 %v108, %v112
    %v115 = vmax.f32 %v113, 0.0
    %v116 = vmax.f32 %v114, 0.0
    %v117 = vmul.f32 %v115, 0.015625
    %v118 = vmul.f32 %v116, 0.015625
    %v119 = vld [vmem:[%s3] sm:$0x1]
    %v120 = vadd.f32 %v117, 1e-12
    %v121 = vadd.f32 %v118, 1e-12
    %v122 = vrsqrt.pop %v120
    %v123 = vmul.f32 %v122, %v120
    %v124 = vmul.f32 %v123, %v122
    %v125 = vmul.f32 0.5, %v124
    %v126 = vsub.f32 1.5, %v125
    %v127 = vmul.f32 %v122, %v126
    %vm128 = vweird.f32 %v120
    %vm129 = vweird.f32 %v122
    %vm130 = vmor %vm128, %vm129
    %v131 = vsel %vm130, %v122, %v127
    %v132 = vrsqrt.pop %v121
    %v133 = vmul.f32 %v132, %v121
    %v134 = vmul.f32 %v133, %v132
    %v135 = vmul.f32 0.5, %v134
    %v136 = vsub.f32 1.5, %v135
    %v137 = vmul.f32 %v132, %v136
    %vm138 = vweird.f32 %v121
    %vm139 = vweird.f32 %v132
    %vm140 = vmor %vm138, %vm139
    %v141 = vsel %vm140, %v132, %v137
    %v143 = vperm.slane %v119, 0
    %v145 = vmul.f32 %v143, %v131
    %v146 = vmul.f32 %v143, %v141
    %v147 = vmul.f32 %v101, %v145
    %v148 = vmul.f32 %v102, %v146
    %v149 = vld [vmem:[%s4] sm:$0x1]
    %v151 = vperm.slane %v149, 0
    %v153 = vadd.f32 %v147, %v151
    %v154 = vadd.f32 %v148, %v151
    %155 = vst [vmem:[#allocation7] sm:$0xff] %v153
    %156 = vst [vmem:[#allocation7 + $0x8] sm:$0xff] %v154
    // Predicated region
    $region30: #{tpu_custom_call.1} parent=1 // pred_check
      _
    $region31: #{tpu_custom_call.1} parent=1 // pred_check_branch
      %158 = sbr.rel (0) target = $region33
    $region32: #{tpu_custom_call.1} parent=1 // pred_region
      %160 = vsyncadd [#allocation4], 0
      %s161 = sshll.u32 [#allocation7], 4
      %s162 = int_to_ptr.vmem [resolvable:$true] %s161
      %s163 = sshll.u32 %s5, 4
      %s164 = int_to_ptr.hbm [resolvable:$true] %s163
      %169 = dma.vmem_to_hbm [thread:$0]  %s162, 256, %s164, [#allocation4], 128, 128, 8
    $region33: #{tpu_custom_call.1} parent=1 // pred_fallthru
      _
    // Predicated region
    $region34: #{tpu_custom_call.1} parent=1 // pred_check
      _
    $region35: #{tpu_custom_call.1} parent=1 // pred_check_branch
      %171 = sbr.rel (0) target = $region37
    $region36: #{tpu_custom_call.1} parent=1 // pred_region
      %173 = dma.done [#allocation4], 256
    $region37: #{tpu_custom_call.1} parent=1 // pred_fallthru
      _
    %174 = vsyncpa [#allocation3], 1
    %175 = vsyncpa [#allocation6], 1
    %176 = vsyncpa [#allocation4], 1

// kernel: tpu_custom_call.1
$region0: #{tpu_custom_call.1}
  #allocation0 [shape = 'u32[]', space=smem, size = 0x4, offset = 0x4, fixed_abs, tag = 'smem constant byte address 0x4 - core index']
  #allocation1 [shape = 'u32[72,128]{1,0:T(1,128)}', space=vmem, size = 0x9000, scoped, tag = 'internal scratch']
  %s0 = inlined_call_operand.hbm [shape: f32[16,32], index: 0, kind: input, shape index: {}]
  %s1 = inlined_call_operand.hbm [shape: bf16[32,128], index: 1, kind: input, shape index: {}]
  %s2 = inlined_call_operand.vmem [shape: f32[1,128], index: 2, kind: input, shape index: {}]
  %s3 = inlined_call_operand.vmem [shape: f32[1,128], index: 3, kind: input, shape index: {}]
  %s4 = inlined_call_operand.vmem [shape: f32[1,128], index: 4, kind: input, shape index: {}]
  %s5 = inlined_call_operand.hbm [shape: f32[16,128], index: 5, kind: output, shape index: {}]
  %s6 = sld [smem:[#allocation0]]
  $region38: #{tpu_custom_call.1} parent=0
    _
  %s8 = ssub.s32 1, %s6
  %s9 = scalar_select 0, %s8, %s6
  $region1: #{tpu_custom_call.1} parent=0
    #allocation2 [shape = 'u8[8192]{0}', space=vmem, size = 0x2000, scoped, tag = 'input window, operand 0, single buffered']
    #allocation3 [shape = 's32[1]{0}', space=sflag, size = 0x4, scoped, tag = 'scoped memory for tpu_custom_call.1']
    #allocation4 [shape = 's32[1]{0}', space=sflag, size = 0x4, scoped, tag = 'scoped memory for tpu_custom_call.1']
    #allocation5 [shape = 'u8[8192]{0}', space=vmem, size = 0x2000, scoped, tag = 'input window, operand 1, single buffered']
    #allocation6 [shape = 's32[1]{0}', space=sflag, size = 0x4, scoped, tag = 'scoped memory for tpu_custom_call.1']
    #allocation7 [shape = 'u8[8192]{0}', space=vmem, size = 0x2000, scoped, tag = 'output window, operand 0, single buffered']
    %10 = vsyncpa [#allocation3], 0
    %11 = vsyncpa [#allocation6], 0
    %12 = vsyncpa [#allocation4], 0
    // Predicated region
    $region2: #{tpu_custom_call.1} parent=1 // pred_check
      _
    $region3: #{tpu_custom_call.1} parent=1 // pred_check_branch
      %14 = sbr.rel (0) target = $region5
    $region4: #{tpu_custom_call.1} parent=1 // pred_region
      %16 = vsyncadd [#allocation3], 0
      %s17 = sshll.u32 %s0, 4
      %s18 = int_to_ptr.hbm [resolvable:$true] %s17
      %s19 = sshll.u32 [#allocation2], 4
      %s20 = int_to_ptr.vmem [resolvable:$true] %s19
      %25 = dma.hbm_to_vmem [thread:$0]  %s18, 256, %s20, [#allocation3], 128, 128, 8
    $region5: #{tpu_custom_call.1} parent=1 // pred_fallthru
      _
    // Predicated region
    $region6: #{tpu_custom_call.1} parent=1 // pred_check
      _
    $region7: #{tpu_custom_call.1} parent=1 // pred_check_branch
      %27 = sbr.rel (0) target = $region9
    $region8: #{tpu_custom_call.1} parent=1 // pred_region
      %29 = vsyncadd [#allocation6], 0
      %s30 = sshll.u32 %s1, 4
      %s31 = int_to_ptr.hbm [resolvable:$true] %s30
      %s32 = sshll.u32 [#allocation5], 4
      %s33 = int_to_ptr.vmem [resolvable:$true] %s32
      %38 = dma.hbm_to_vmem [thread:$0]  %s31, 256, %s33, [#allocation6], 64, 64, 4
    $region9: #{tpu_custom_call.1} parent=1 // pred_fallthru
      _
    // Predicated region
    $region10: #{tpu_custom_call.1} parent=1 // pred_check
      _
    $region11: #{tpu_custom_call.1} parent=1 // pred_check_branch
      %40 = sbr.rel (0) target = $region13
    $region12: #{tpu_custom_call.1} parent=1 // pred_region
      _
    $region13: #{tpu_custom_call.1} parent=1 // pred_fallthru
      _
    // Predicated region
    $region14: #{tpu_custom_call.1} parent=1 // pred_check
      _
    $region15: #{tpu_custom_call.1} parent=1 // pred_check_branch
      %42 = sbr.rel (0) target = $region17
    $region16: #{tpu_custom_call.1} parent=1 // pred_region
      _
    $region17: #{tpu_custom_call.1} parent=1 // pred_fallthru
      _
    // Predicated region
    $region18: #{tpu_custom_call.1} parent=1 // pred_check
      _
    $region19: #{tpu_custom_call.1} parent=1 // pred_check_branch
      %44 = sbr.rel (0) target = $region21
    $region20: #{tpu_custom_call.1} parent=1 // pred_region
      _
    $region21: #{tpu_custom_call.1} parent=1 // pred_fallthru
      _
    // Predicated region
    $region22: #{tpu_custom_call.1} parent=1 // pred_check
      _
    $region23: #{tpu_custom_call.1} parent=1 // pred_check_branch
      %46 = sbr.rel (0) target = $region25
    $region24: #{tpu_custom_call.1} parent=1 // pred_region
      %48 = dma.done [#allocation3], 256
    $region25: #{tpu_custom_call.1} parent=1 // pred_fallthru
      _
    // Predicated region
    $region26: #{tpu_custom_call.1} parent=1 // pred_check
      _
    $region27: #{tpu_custom_call.1} parent=1 // pred_check_branch
      %50 = sbr.rel (0) target = $region29
    $region28: #{tpu_custom_call.1} parent=1 // pred_region
      %52 = dma.done [#allocation6], 256
    $region29: #{tpu_custom_call.1} parent=1 // pred_fallthru
      _
    %v54 = vld [vmem:[#allocation2] sm:$0xff]
    %v55 = vld [vmem:[#allocation2 + $0x8] sm:$0xff]
    %v56 = vpack.c.bf16 %v55, %v54
    %v57 = vld [vmem:[#allocation5] sm:$0xf]
    %v58 = vld [vmem:[#allocation5 + $0x4] sm:$0xf]
    %v59 = vld [vmem:[#allocation5 + $0x8] sm:$0xf]
    %v60 = vld [vmem:[#allocation5 + $0xc] sm:$0xf]
    %v61 = vld [vmem:[%s2] sm:$0x1]
    %v63 = vperm.slane %v61, 0
    %v69 = vunpack.c.l.b16 %v57
    %v70 = vunpack.c.l.b16 %v58
    %v71 = vunpack.c.l.b16 %v59
    %v72 = vunpack.c.l.b16 %v60
    %v73 = vpack.c.b16 %v70, %v69
    %v74 = vpack.c.b16 %v72, %v71
    %vm77 = vcmask 261120
    %v79 = vsel %vm77, %v56, 0
    %81 = vmatpush.bf16.msra.mxu0 0
    %82 = vmatpush.bf16.msra.mxu0 0
    %83 = vmatpush.bf16.msra.mxu0 0
    %84 = vmatpush.bf16.msra.mxu0 0
    %85 = vmatpush.bf16.msra.mxu0 0
    %86 = vmatpush.bf16.msra.mxu0 0
    %87 = vmatpush.bf16.msra.mxu0 %v74
    %88 = vmatpush.bf16.msra.mxu0 %v73
    %89 = vmatmul.bf16.gmra.mxu0 %v79
    %v90 = vpop.f32.mrf.mxu0
    %v91 = vadd.f32 %v63, %v90
    %v92 = vpop.f32.mrf.mxu0
    %v93 = vadd.f32 %v63, %v92
    %94 = vdwg.mxu0
    %95 = vadd.xlane.f32.xlu0 %v91
    %v96 = vpop.xlane.xlu0 %95
    %97 = vadd.xlane.f32.xlu0 %v93
    %v98 = vpop.xlane.xlu0 %97
    %v99 = vmul.f32 %v96, 0.015625
    %v100 = vmul.f32 %v98, 0.015625
    %v101 = vsub.f32 %v91, %v99
    %v102 = vsub.f32 %v93, %v100
    %v103 = vmul.f32 %v101, %v101
    %v104 = vmul.f32 %v102, %v102
    %105 = vadd.xlane.f32.xlu0 %v103
    %v106 = vpop.xlane.xlu0 %105
    %107 = vadd.xlane.f32.xlu0 %v104
    %v108 = vpop.xlane.xlu0 %107
    %v109 = vmul.f32 %v99, %v99
    %v110 = vmul.f32 %v100, %v100
    %v111 = vmul.f32 %v109, 64.0
    %v112 = vmul.f32 %v110, 64.0
    %v113 = vsub.f32 %v106, %v111
    %v114 = vsub.f32 %v108, %v112
    %v115 = vmax.f32 %v113, 0.0
    %v116 = vmax.f32 %v114, 0.0
    %v117 = vmul.f32 %v115, 0.015625
    %v118 = vmul.f32 %v116, 0.015625
    %v119 = vld [vmem:[%s3] sm:$0x1]
    %v120 = vadd.f32 %v117, 1e-12
    %v121 = vadd.f32 %v118, 1e-12
    %v122 = vrsqrt.pop %v120
    %v123 = vmul.f32 %v122, %v120
    %v124 = vmul.f32 %v123, %v122
    %v125 = vmul.f32 0.5, %v124
    %v126 = vsub.f32 1.5, %v125
    %v127 = vmul.f32 %v122, %v126
    %vm128 = vweird.f32 %v120
    %vm129 = vweird.f32 %v122
    %vm130 = vmor %vm128, %vm129
    %v131 = vsel %vm130, %v122, %v127
    %v132 = vrsqrt.pop %v121
    %v133 = vmul.f32 %v132, %v121
    %v134 = vmul.f32 %v133, %v132
    %v135 = vmul.f32 0.5, %v134
    %v136 = vsub.f32 1.5, %v135
    %v137 = vmul.f32 %v132, %v136
    %vm138 = vweird.f32 %v121
    %vm139 = vweird.f32 %v132
    %vm140 = vmor %vm138, %vm139
    %v141 = vsel %vm140, %v132, %v137
    %v143 = vperm.slane %v119, 0
    %v145 = vmul.f32 %v143, %v131
    %v146 = vmul.f32 %v143, %v141
    %v147 = vmul.f32 %v101, %v145
    %v148 = vmul.f32 %v102, %v146
    %v149 = vld [vmem:[%s4] sm:$0x1]
    %v151 = vperm.slane %v149, 0
    %v153 = vadd.f32 %v147, %v151
    %v154 = vadd.f32 %v148, %v151
    %155 = vst [vmem:[#allocation7] sm:$0xff] %v153
    %156 = vst [vmem:[#allocation7 + $0x8] sm:$0xff] %v154
    // Predicated region
    $region30: #{tpu_custom_call.1} parent=1 // pred_check
      _
    $region31: #{tpu_custom_call.1} parent=1 // pred_check_branch
      %158 = sbr.rel (0) target = $region33
    $region32: #{tpu_custom_call.1} parent=1 // pred_region
      %160 = vsyncadd [#allocation4], 0
      %s161 = sshll.u32 [#allocation7], 4
      %s162 = int_to_ptr.vmem [resolvable:$true] %s161
      %s163 = sshll.u32 %s5, 4
      %s164 = int_to_ptr.hbm [resolvable:$true] %s163
      %169 = dma.vmem_to_hbm [thread:$0]  %s162, 256, %s164, [#allocation4], 128, 128, 8
    $region33: #{tpu_custom_call.1} parent=1 // pred_fallthru
      _
    // Predicated region
    $region34: #{tpu_custom_call.1} parent=1 // pred_check
      _
    $region35: #{tpu_custom_call.1} parent=1 // pred_check_branch
      %171 = sbr.rel (0) target = $region37
    $region36: #{tpu_custom_call.1} parent=1 // pred_region
      %173 = dma.done [#allocation4], 256
    $region37: #{tpu_custom_call.1} parent=1 // pred_fallthru
      _
    %174 = vsyncpa [#allocation3], 1
    %175 = vsyncpa [#allocation6], 1
    %176 = vsyncpa [#allocation4], 1

</llo_original>
